<compile_context>
chip_gen: v6e
topology: v6e:2x2x1
jax: 0.10.0
libtpu: 0.0.40
codegen_flags: <defaults>
</compile_context>

<pallas_src>
import functools
import math

import jax
import jax.numpy as jnp
from jax import lax
from jax.experimental import pallas as pl
from jax.experimental.pallas import tpu as pltpu

EPSILON = 1e-09


def _round_up(x, m):
    return ((x + m - 1) // m) * m


# ----------------------------------------------------------------------------
# Fused forward builder (cached per static architecture + batch size)
# ----------------------------------------------------------------------------
@functools.lru_cache(maxsize=None)
def _build_fused_snn(arch, batch):
    """arch: tuple of (is_output: bool, in_dim: int, units: int) per layer."""
    n_layers = len(arch)
    n_hidden = sum(1 for a in arch if not a[0])
    n_hid_rows = _round_up(max(n_hidden, 1), 8)        # sublane-padded min rows

    in_dim0 = arch[0][1]
    in_pad0 = _round_up(in_dim0, 128)
    units_pad = [_round_up(a[2], 128) for a in arch]
    in_pads = [in_pad0] + units_pad[:-1]               # padded input dim per layer
    out_pad = units_pad[-1]
    max_units_pad = max(units_pad)

    # single-buffered bf16 resident weights
    weight_bytes = sum(in_pads[li] * units_pad[li] for li in range(n_layers)) * 2

    def _vmem_estimate(bt):
        return (2 * bt * in_pad0 * 4                    # x tile (double-buffered)
                + 2 * bt * out_pad * 4                  # out tile (double-buffered)
                + weight_bytes                          # weights (single-buffered, bf16)
                + n_layers * max_units_pad * 4          # packed D (single-buffered)
                + 2 * n_hid_rows * max_units_pad * 4    # per-tile min output
                + 10 * bt * max(max_units_pad, in_pad0) * 4)   # in-kernel temporaries

    # Biggest batch tile whose footprint stays comfortably inside VMEM on all
    # of v5e/v6e (128 MiB) and v7x (64 MiB).
    batch_tile = min(_round_up(batch, 8), 512)
    while batch_tile > 8 and _vmem_estimate(batch_tile) > (40 << 20):
        batch_tile = max(8, _round_up(batch_tile // 2, 8))
    batch_pad = _round_up(batch, batch_tile)
    num_tiles = batch_pad // batch_tile
    grid = (num_tiles,)

    vmem_limit = int(min(max(_vmem_estimate(batch_tile) + (8 << 20), 32 << 20),
                         48 << 20))

    # TODO(synk): if any single padded W exceeds a few MiB (or the resident sum
    # approaches the VMEM budget, hit ~2x earlier on v7x), add a K-tiling grid
    # axis / pltpu.emit_pipeline so weight blocks stream HBM->VMEM per layer
    # instead of staying fully resident.

    # ------------------------------------------------------------------ kernel
    def kernel(tp_ref, x_ref, *refs):
        # refs = W_0 ... W_{L-1}, D_packed, out_ref, min_ref
        w_refs = refs[:n_layers]
        d_ref = refs[n_layers]
        out_ref = refs[n_layers + 1]
        min_ref = refs[n_layers + 2]

        step = pl.program_id(0)

        # valid-row mask for this batch tile (excludes batch padding from min)
        row_ids = (lax.broadcasted_iota(jnp.int32, (batch_tile, 1), 0)
                   + step * batch_tile)
        row_valid = row_ids < batch

        # deterministic init of the (sublane-padded) per-tile min block
        min_ref[...] = jnp.zeros((n_hid_rows, max_units_pad), jnp.float32)

        cur = x_ref[...]                                    # f32 (batch_tile, in_pad0)
        h_idx = 0
        for li in range(n_layers):
            is_out, _, units = arch[li]
            W = w_refs[li][...]                             # bf16 (in_pad, units_pad)
            D = d_ref[li:li + 1, :units_pad[li]]            # f32  (1, units_pad)
            t_min_prev = tp_ref[3 * li + 0]
            t_min = tp_ref[3 * li + 1]
            t_max = tp_ref[3 * li + 2]

            if is_out:
                # output = (D_i / safe_time_diff) * time_diff + (t_min - tj) @ W
                wmx = jnp.dot((t_min - cur).astype(jnp.bfloat16), W,
                              preferred_element_type=jnp.float32)
                td = t_min - t_min_prev
                safe = jnp.where(td == 0.0, jnp.float32(EPSILON), td)
                cur = (D / safe) * td + wmx
            else:
                # ti = (tj - t_min) @ W + (t_max - t_min - D_i) + t_min, clamp t_max
                thr = t_max - t_min - D
                ti = jnp.dot((cur - t_min).astype(jnp.bfloat16), W,
                             preferred_element_type=jnp.float32)
                ti = ti + thr + t_min
                ti = jnp.where(ti < t_max, ti, t_max)

                # Per-column partial min over real (row, col) spikes; all
                # cross-lane / cross-tile reduction is deferred to the wrapper.
                # TODO(synk): isfinite dropped (perf review): after the clamp
                # only -inf inputs could differ from the reference guard.
                col_ids = lax.broadcasted_iota(
                    jnp.int32, (batch_tile, units_pad[li]), 1)
                valid = row_valid & (col_ids < units) & (ti < t_max)
                masked = jnp.where(valid, ti, t_max)        # t_max = "no spike"
                pcm = jnp.min(masked, axis=0)               # (units_pad,)
                if units_pad[li] < max_units_pad:
                    pcm = jnp.concatenate(
                        [pcm,
                         jnp.broadcast_to(t_max, (max_units_pad - units_pad[li],))],
                        axis=0)
                min_ref[h_idx, :] = pcm

                cur = ti
                h_idx += 1

        out_ref[...] = cur.astype(out_ref.dtype)

    # --------------------------------------------------------------- specs
    in_specs = [
        # time params live in SMEM: changing them never recompiles the kernel
        pl.BlockSpec(memory_space=pltpu.MemorySpace.SMEM),
        pl.BlockSpec((batch_tile, in_pad0), lambda i: (i, 0)),
    ]
    for li in range(n_layers):
        in_specs.append(pl.BlockSpec((in_pads[li], units_pad[li]),
                                     lambda i: (0, 0),
                                     pipeline_mode=pl.Buffered(1)))
    in_specs.append(pl.BlockSpec((n_layers, max_units_pad),
                                 lambda i: (0, 0),
                                 pipeline_mode=pl.Buffered(1)))

    out_specs = (
        pl.BlockSpec((batch_tile, out_pad), lambda i: (i, 0)),
        # per-tile lane-dense min rows: no cross-iteration accumulator
        pl.BlockSpec((n_hid_rows, max_units_pad), lambda i: (i, 0)),
    )
    out_shape = (
        jax.ShapeDtypeStruct((batch_pad, out_pad), jnp.float32),
        jax.ShapeDtypeStruct((num_tiles * n_hid_rows, max_units_pad), jnp.float32),
    )

    flops = 2 * batch_pad * sum(in_pads[li] * units_pad[li]
                                for li in range(n_layers))
    bytes_accessed = (4 * batch_pad * in_pad0
                      + weight_bytes
                      + 4 * n_layers * max_units_pad
                      + 4 * batch_pad * out_pad
                      + 4 * num_tiles * n_hid_rows * max_units_pad
                      + 4 * 3 * n_layers)

    fused_call = pl.pallas_call(
        kernel,
        grid=grid,
        in_specs=in_specs,
        out_specs=out_specs,
        out_shape=out_shape,
        compiler_params=pltpu.CompilerParams(
            # no cross-tile dependence any more -> batch tiles can shard across
            # the two TensorCores on v7x.
            dimension_semantics=("parallel",),
            vmem_limit_bytes=vmem_limit,
        ),
        cost_estimate=pl.CostEstimate(
            flops=flops, transcendentals=0, bytes_accessed=bytes_accessed),
    )

    # --------------------------------------------------------------- wrapper
    def forward(x, t_params, d_packed, *w_padded):
        xp = jnp.zeros((batch_pad, in_pad0), jnp.float32)
        xp = xp.at[:batch, :in_dim0].set(x.astype(jnp.float32))

        out_p, min_p = fused_call(t_params.astype(jnp.float32), xp,
                                  *w_padded, d_packed)
        out = out_p[:batch, :arch[-1][2]]
        min_rows = min_p.reshape(num_tiles, n_hid_rows, max_units_pad)
        mins = jnp.min(min_rows, axis=(0, 2))[:n_hidden]    # (n_hidden,)
        return out, mins

    return jax.jit(forward), max_units_pad


# ----------------------------------------------------------------------------
# Model glue (mirrors SNNModel made of SpikingDense layers)
# ----------------------------------------------------------------------------
def glorot_uniform(key, in_dim, units):
    limit = math.sqrt(6.0 / (in_dim + units))
    return jax.random.uniform(
        key, (in_dim, units), minval=-limit, maxval=limit, dtype=jnp.float32)


class SpikingDenseJax:
    def __init__(self, key, input_dim, units, output_layer=False):
        self.units = units
        self.input_dim = input_dim
        self.output_layer = output_layer
        self.kernel = glorot_uniform(key, input_dim, units)   # (input_dim, units) f32
        self.D_i = jnp.zeros((units,), jnp.float32)
        # buffers (defaults match the PyTorch register_buffer values)
        self.t_min_prev = 0.0
        self.t_min = 0.0
        self.t_max = 1.0
        # padded bf16 weight cache: re-padded only if self.kernel is replaced
        self._padded_kernel = None
        self._padded_src = None
        # TODO(synk): robustness_params (noise/quantization) are a placeholder
        # in the PyTorch spec as well and are not implemented here.

    def set_time_params(self, t_min_prev, t_min, t_max):
        self.t_min_prev = float(t_min_prev)
        self.t_min = float(t_min)
        self.t_max = float(t_max)

    def padded_kernel_bf16(self):
        if self._padded_kernel is None or self._padded_src is not self.kernel:
            in_pad = _round_up(self.input_dim, 128)
            u_pad = _round_up(self.units, 128)
            Wp = jnp.zeros((in_pad, u_pad), jnp.bfloat16)
            Wp = Wp.at[:self.input_dim, :self.units].set(
                self.kernel.astype(jnp.bfloat16))
            self._padded_kernel = Wp
            self._padded_src = self.kernel
        return self._padded_kernel


class SNNModelJax:
    def __init__(self):
        self.layers_list = []
        self._d_cache = None
        self._d_cache_srcs = None

    def add(self, layer):
        self.layers_list.append(layer)

    def _packed_D(self, max_units_pad):
        srcs = tuple(l.D_i for l in self.layers_list)
        stale = (self._d_cache is None
                 or self._d_cache.shape != (len(srcs), max_units_pad)
                 or self._d_cache_srcs is None
                 or len(self._d_cache_srcs) != len(srcs)
                 or any(a is not b for a, b in zip(self._d_cache_srcs, srcs)))
        if stale:
            Dp = jnp.zeros((len(srcs), max_units_pad), jnp.float32)
            for li, l in enumerate(self.layers_list):
                Dp = Dp.at[li, :l.units].set(l.D_i.astype(jnp.float32))
            self._d_cache = Dp
            self._d_cache_srcs = srcs
        return self._d_cache

    def __call__(self, x):
        x = jnp.asarray(x, jnp.float32)
        batch = x.shape[0]
        arch = tuple((l.output_layer, l.input_dim, l.units)
                     for l in self.layers_list)
        fwd, max_units_pad = _build_fused_snn(arch, batch)

        t_params = jnp.asarray(
            [[l.t_min_prev, l.t_min, l.t_max] for l in self.layers_list],
            dtype=jnp.float32).reshape(-1)
        d_packed = self._packed_D(max_units_pad)
        w_padded = [l.padded_kernel_bf16() for l in self.layers_list]

        out, mins = fwd(x, t_params, d_packed, *w_padded)
        n_hidden = sum(1 for l in self.layers_list if not l.output_layer)
        min_ti_list = [mins[h].reshape(1) for h in range(n_hidden)]
        return out, min_ti_list


# ----------------------------------------------------------------------------
# Pure-JAX reference (matches the PyTorch forward; sanity check)
# ----------------------------------------------------------------------------
def reference_forward(model, x):
    cur = jnp.asarray(x, jnp.float32)
    mins = []
    for layer in model.layers_list:
        W, D_i = layer.kernel, layer.D_i
        if layer.output_layer:
            wmx = jnp.matmul(layer.t_min - cur, W)
            td = layer.t_min - layer.t_min_prev
            safe = td if td != 0.0 else EPSILON
            cur = (D_i / safe) * td + wmx
        else:
            thr = layer.t_max - layer.t_min - D_i
            ti = jnp.matmul(cur - layer.t_min, W) + thr + layer.t_min
            ti = jnp.where(ti < layer.t_max, ti, layer.t_max)
            mask = jnp.isfinite(ti) & (ti < layer.t_max)
            masked = jnp.where(mask, ti, jnp.inf)
            m = jnp.min(masked)
            mins.append(jnp.where(jnp.isfinite(m), m, layer.t_max).reshape(1))
            cur = ti
    return cur, mins


if __name__ == "__main__":
    key = jax.random.PRNGKey(0)
    k_x, k1, k2, k3 = jax.random.split(key, 4)

    batch, in_dim, hidden, n_out = 2, 16, 32, 10

    # Build SNN: two hidden SpikingDense layers + one output SpikingDense layer.
    model = SNNModelJax()
    l1 = SpikingDenseJax(k1, in_dim, hidden, output_layer=False)
    l2 = SpikingDenseJax(k2, hidden, hidden, output_layer=False)
    l3 = SpikingDenseJax(k3, hidden, n_out, output_layer=True)
    # Time bounds set externally (as in the PyTorch training loop).
    l1.set_time_params(0.0, 1.0, 2.0)
    l2.set_time_params(1.0, 2.0, 3.0)
    l3.set_time_params(2.0, 3.0, 4.0)
    model.add(l1)
    model.add(l2)
    model.add(l3)

    # Input spike times (batch, input_dim) in [0, 1].
    x = jax.random.uniform(k_x, (batch, in_dim), dtype=jnp.float32)

    final_out, min_ti_list = model(x)
    final_out = jax.block_until_ready(final_out)
    min_ti_list = [jax.block_until_ready(m) for m in min_ti_list]

    # Changing time params must NOT recompile (they are SMEM data, not consts).
    l2.set_time_params(1.0, 2.0, 2.5)
    final_out2, min_ti_list2 = model(x)
    final_out2 = jax.block_until_ready(final_out2)

    # Sanity check vs. pure-JAX (f32) reference.  MXU operands are bf16 in the
    # kernel, so tolerances are set accordingly.
    TOL = dict(rtol=5e-2, atol=5e-2)
    ref_out, ref_mins = reference_forward(model, x)
    assert final_out2.shape == (batch, n_out)
    assert len(min_ti_list2) == 2 and all(m.shape == (1,) for m in min_ti_list2)
    assert jnp.allclose(final_out2, ref_out, **TOL)
    for m, rm in zip(min_ti_list2, ref_mins):
        assert jnp.allclose(m, rm, **TOL)

    # Re-check the first parameterization against its own reference.
    l2.set_time_params(1.0, 2.0, 3.0)
    ref_out1, ref_mins1 = reference_forward(model, x)
    assert jnp.allclose(final_out, ref_out1, **TOL)
    for m, rm in zip(min_ti_list, ref_mins1):
        assert jnp.allclose(m, rm, **TOL)

    print("KERNEL_OK")
</pallas_src>

<mosaic_0001>
module attributes {stable_mosaic.version = 11 : i64} {
  func.func @kernel(%arg0: i32, %arg1: memref<9xf32, #tpu.memory_space<smem>>, %arg2: memref<8x128xf32, #tpu.memory_space<vmem>>, %arg3: memref<128x128xbf16, #tpu.memory_space<vmem>>, %arg4: memref<128x128xbf16, #tpu.memory_space<vmem>>, %arg5: memref<128x128xbf16, #tpu.memory_space<vmem>>, %arg6: memref<3x128xf32, #tpu.memory_space<vmem>>, %arg7: memref<8x128xf32, #tpu.memory_space<vmem>>, %arg8: memref<8x128xf32, #tpu.memory_space<vmem>>) attributes {dimension_semantics = [#tpu.dimension_semantics<parallel>], iteration_bounds = array<i64: 1>, scalar_prefetch = 0 : i64, scratch_operands = 0 : i64, tpu.core_type = #tpu.core_type<tc>, window_params = [{transform_indices = @transform_0, window_bounds = array<i64: 9>}, {transform_indices = @transform_1, window_bounds = array<i64: 8, 128>}, {pipeline_mode = #tpu.pipeline_mode<synchronous>, transform_indices = @transform_2, window_bounds = array<i64: 128, 128>}, {pipeline_mode = #tpu.pipeline_mode<synchronous>, transform_indices = @transform_3, window_bounds = array<i64: 128, 128>}, {pipeline_mode = #tpu.pipeline_mode<synchronous>, transform_indices = @transform_4, window_bounds = array<i64: 128, 128>}, {pipeline_mode = #tpu.pipeline_mode<synchronous>, transform_indices = @transform_5, window_bounds = array<i64: 3, 128>}, {transform_indices = @transform_6, window_bounds = array<i64: 8, 128>}, {transform_indices = @transform_7, window_bounds = array<i64: 8, 128>}]} {
    %0 = tpu.iota {dimensions = array<i32: 0>} : vector<8x1xi32>
    %c8_i32 = arith.constant 8 : i32
    %1 = arith.muli %arg0, %c8_i32 : i32
    %2 = vector.broadcast %1 : i32 to vector<8x1xi32>
    %3 = arith.addi %0, %2 : vector<8x1xi32>
    %c2_i32 = arith.constant 2 : i32
    %4 = vector.broadcast %c2_i32 : i32 to vector<8x1xi32>
    %5 = arith.cmpi slt, %3, %4 : vector<8x1xi32>
    %cst = arith.constant 0.000000e+00 : f32
    %6 = vector.broadcast %cst : f32 to vector<8x128xf32>
    %c0 = arith.constant 0 : index
    %c0_0 = arith.constant 0 : index
    %7 = vector.load %arg8[%c0, %c0_0] : memref<8x128xf32, #tpu.memory_space<vmem>>, vector<8x128xf32>
    tpu.vector_store %arg8[%c0, %c0_0], %6 {strides = array<i32>} : memref<8x128xf32, #tpu.memory_space<vmem>>, vector<8x128xf32>,
    %c0_1 = arith.constant 0 : index
    %c0_2 = arith.constant 0 : index
    %8 = vector.load %arg2[%c0_1, %c0_2] : memref<8x128xf32, #tpu.memory_space<vmem>>, vector<8x128xf32>
    %c0_3 = arith.constant 0 : index
    %c0_4 = arith.constant 0 : index
    %9 = vector.load %arg3[%c0_3, %c0_4] : memref<128x128xbf16, #tpu.memory_space<vmem>>, vector<128x128xbf16>
    %c0_5 = arith.constant 0 : index
    %c0_6 = arith.constant 0 : index
    %10 = vector.load %arg6[%c0_5, %c0_6] : memref<3x128xf32, #tpu.memory_space<vmem>>, vector<1x128xf32>
    %c1 = arith.constant 1 : index
    %11 = memref.load %arg1[%c1] : memref<9xf32, #tpu.memory_space<smem>>
    %c2 = arith.constant 2 : index
    %12 = memref.load %arg1[%c2] : memref<9xf32, #tpu.memory_space<smem>>
    %13 = arith.subf %12, %11 : f32
    %14 = vector.broadcast %13 : f32 to vector<1x128xf32>
    %15 = arith.subf %14, %10 : vector<1x128xf32>
    %16 = vector.broadcast %11 : f32 to vector<8x128xf32>
    %17 = arith.subf %8, %16 : vector<8x128xf32>
    %18 = arith.truncf %17 : vector<8x128xf32> to vector<8x128xbf16>
    %cst_7 = arith.constant dense<0.000000e+00> : vector<8x128xf32>
    %19 = tpu.matmul %18, %9, %cst_7 {dimension_numbers = #tpu.dot_dimension_numbers<[1], [0], [0], [1], [0, 0, 1, 1], [], []>} : vector<8x128xbf16>, vector<128x128xbf16>, vector<8x128xf32> -> vector<8x128xf32>
    %20 = vector.broadcast %15 : vector<1x128xf32> to vector<8x128xf32>
    %21 = arith.addf %19, %20 : vector<8x128xf32>
    %22 = vector.broadcast %11 : f32 to vector<8x128xf32>
    %23 = arith.addf %21, %22 : vector<8x128xf32>
    %24 = vector.broadcast %12 : f32 to vector<8x128xf32>
    %25 = arith.cmpf olt, %23, %24 : vector<8x128xf32>
    %26 = vector.broadcast %12 : f32 to vector<8x128xf32>
    %27 = arith.select %25, %23, %26 : vector<8x128xi1>, vector<8x128xf32>
    %28 = tpu.iota {dimensions = array<i32: 1>} : vector<8x128xi32>
    %c32_i32 = arith.constant 32 : i32
    %29 = vector.broadcast %c32_i32 : i32 to vector<8x128xi32>
    %30 = arith.cmpi slt, %28, %29 : vector<8x128xi32>
    %31 = vector.broadcast %5 : vector<8x1xi1> to vector<8x128xi1>
    %32 = arith.andi %31, %30 : vector<8x128xi1>
    %33 = vector.broadcast %12 : f32 to vector<8x128xf32>
    %34 = arith.cmpf olt, %27, %33 : vector<8x128xf32>
    %35 = arith.andi %32, %34 : vector<8x128xi1>
    %36 = vector.broadcast %12 : f32 to vector<8x128xf32>
    %37 = arith.select %35, %27, %36 : vector<8x128xi1>, vector<8x128xf32>
    %cst_8 = arith.constant dense<0x7F800000> : vector<128xf32>
    %38 = vector.multi_reduction <minimumf>, %37, %cst_8 [0] : vector<8x128xf32> to vector<128xf32>
    %c0_9 = arith.constant 0 : index
    %c0_10 = arith.constant 0 : index
    %39 = vector.load %arg8[%c0_9, %c0_10] : memref<8x128xf32, #tpu.memory_space<vmem>>, vector<1x128xf32>
    %40 = vector.shape_cast %39 : vector<1x128xf32> to vector<128xf32>
    %41 = vector.shape_cast %38 : vector<128xf32> to vector<1x128xf32>
    tpu.vector_store %arg8[%c0_9, %c0_10], %41 {strides = array<i32>} : memref<8x128xf32, #tpu.memory_space<vmem>>, vector<1x128xf32>,
    %c0_11 = arith.constant 0 : index
    %c0_12 = arith.constant 0 : index
    %42 = vector.load %arg4[%c0_11, %c0_12] : memref<128x128xbf16, #tpu.memory_space<vmem>>, vector<128x128xbf16>
    %c1_13 = arith.constant 1 : index
    %c0_14 = arith.constant 0 : index
    %43 = vector.load %arg6[%c1_13, %c0_14] : memref<3x128xf32, #tpu.memory_space<vmem>>, vector<1x128xf32>
    %c4 = arith.constant 4 : index
    %44 = memref.load %arg1[%c4] : memref<9xf32, #tpu.memory_space<smem>>
    %c5 = arith.constant 5 : index
    %45 = memref.load %arg1[%c5] : memref<9xf32, #tpu.memory_space<smem>>
    %46 = arith.subf %45, %44 : f32
    %47 = vector.broadcast %46 : f32 to vector<1x128xf32>
    %48 = arith.subf %47, %43 : vector<1x128xf32>
    %49 = vector.broadcast %44 : f32 to vector<8x128xf32>
    %50 = arith.subf %27, %49 : vector<8x128xf32>
    %51 = arith.truncf %50 : vector<8x128xf32> to vector<8x128xbf16>
    %cst_15 = arith.constant dense<0.000000e+00> : vector<8x128xf32>
    %52 = tpu.matmul %51, %42, %cst_15 {dimension_numbers = #tpu.dot_dimension_numbers<[1], [0], [0], [1], [0, 0, 1, 1], [], []>} : vector<8x128xbf16>, vector<128x128xbf16>, vector<8x128xf32> -> vector<8x128xf32>
    %53 = vector.broadcast %48 : vector<1x128xf32> to vector<8x128xf32>
    %54 = arith.addf %52, %53 : vector<8x128xf32>
    %55 = vector.broadcast %44 : f32 to vector<8x128xf32>
    %56 = arith.addf %54, %55 : vector<8x128xf32>
    %57 = vector.broadcast %45 : f32 to vector<8x128xf32>
    %58 = arith.cmpf olt, %56, %57 : vector<8x128xf32>
    %59 = vector.broadcast %45 : f32 to vector<8x128xf32>
    %60 = arith.select %58, %56, %59 : vector<8x128xi1>, vector<8x128xf32>
    %61 = tpu.iota {dimensions = array<i32: 1>} : vector<8x128xi32>
    %c32_i32_16 = arith.constant 32 : i32
    %62 = vector.broadcast %c32_i32_16 : i32 to vector<8x128xi32>
    %63 = arith.cmpi slt, %61, %62 : vector<8x128xi32>
    %64 = vector.broadcast %5 : vector<8x1xi1> to vector<8x128xi1>
    %65 = arith.andi %64, %63 : vector<8x128xi1>
    %66 = vector.broadcast %45 : f32 to vector<8x128xf32>
    %67 = arith.cmpf olt, %60, %66 : vector<8x128xf32>
    %68 = arith.andi %65, %67 : vector<8x128xi1>
    %69 = vector.broadcast %45 : f32 to vector<8x128xf32>
    %70 = arith.select %68, %60, %69 : vector<8x128xi1>, vector<8x128xf32>
    %cst_17 = arith.constant dense<0x7F800000> : vector<128xf32>
    %71 = vector.multi_reduction <minimumf>, %70, %cst_17 [0] : vector<8x128xf32> to vector<128xf32>
    %c1_18 = arith.constant 1 : index
    %c0_19 = arith.constant 0 : index
    %72 = vector.load %arg8[%c1_18, %c0_19] : memref<8x128xf32, #tpu.memory_space<vmem>>, vector<1x128xf32>
    %73 = vector.shape_cast %72 : vector<1x128xf32> to vector<128xf32>
    %74 = vector.shape_cast %71 : vector<128xf32> to vector<1x128xf32>
    tpu.vector_store %arg8[%c1_18, %c0_19], %74 {strides = array<i32>} : memref<8x128xf32, #tpu.memory_space<vmem>>, vector<1x128xf32>,
    %c0_20 = arith.constant 0 : index
    %c0_21 = arith.constant 0 : index
    %75 = vector.load %arg5[%c0_20, %c0_21] : memref<128x128xbf16, #tpu.memory_space<vmem>>, vector<128x128xbf16>
    %c2_22 = arith.constant 2 : index
    %c0_23 = arith.constant 0 : index
    %76 = vector.load %arg6[%c2_22, %c0_23] : memref<3x128xf32, #tpu.memory_space<vmem>>, vector<1x128xf32>
    %c6 = arith.constant 6 : index
    %77 = memref.load %arg1[%c6] : memref<9xf32, #tpu.memory_space<smem>>
    %c7 = arith.constant 7 : index
    %78 = memref.load %arg1[%c7] : memref<9xf32, #tpu.memory_space<smem>>
    %79 = vector.broadcast %78 : f32 to vector<8x128xf32>
    %80 = arith.subf %79, %60 : vector<8x128xf32>
    %81 = arith.truncf %80 : vector<8x128xf32> to vector<8x128xbf16>
    %cst_24 = arith.constant dense<0.000000e+00> : vector<8x128xf32>
    %82 = tpu.matmul %81, %75, %cst_24 {dimension_numbers = #tpu.dot_dimension_numbers<[1], [0], [0], [1], [0, 0, 1, 1], [], []>} : vector<8x128xbf16>, vector<128x128xbf16>, vector<8x128xf32> -> vector<8x128xf32>
    %83 = arith.subf %78, %77 : f32
    %cst_25 = arith.constant 0.000000e+00 : f32
    %84 = arith.cmpf oeq, %83, %cst_25 : f32
    %cst_26 = arith.constant 9.99999971E-10 : f32
    %85 = arith.select %84, %cst_26, %83 : f32
    %86 = vector.broadcast %85 : f32 to vector<1x128xf32>
    %87 = arith.divf %76, %86 : vector<1x128xf32>
    %88 = vector.broadcast %83 : f32 to vector<1x128xf32>
    %89 = arith.mulf %87, %88 : vector<1x128xf32>
    %90 = vector.broadcast %89 : vector<1x128xf32> to vector<8x128xf32>
    %91 = arith.addf %90, %82 : vector<8x128xf32>
    %c0_27 = arith.constant 0 : index
    %c0_28 = arith.constant 0 : index
    %92 = vector.load %arg7[%c0_27, %c0_28] : memref<8x128xf32, #tpu.memory_space<vmem>>, vector<8x128xf32>
    tpu.vector_store %arg7[%c0_27, %c0_28], %91 {strides = array<i32>} : memref<8x128xf32, #tpu.memory_space<vmem>>, vector<8x128xf32>,
    return
  }
  func.func @transform_0(%arg0: i32) -> i32 {
    %c0_i32 = arith.constant 0 : i32
    %c0_i32_0 = arith.constant 0 : i32
    return %c0_i32 : i32
  }
  func.func @transform_1(%arg0: i32) -> (i32, i32) {
    %c0_i32 = arith.constant 0 : i32
    %c0_i32_0 = arith.constant 0 : i32
    return %arg0, %c0_i32 : i32, i32
  }
  func.func @transform_2(%arg0: i32) -> (i32, i32) {
    %c0_i32 = arith.constant 0 : i32
    %c0_i32_0 = arith.constant 0 : i32
    %c0_i32_1 = arith.constant 0 : i32
    return %c0_i32, %c0_i32_0 : i32, i32
  }
  func.func @transform_3(%arg0: i32) -> (i32, i32) {
    %c0_i32 = arith.constant 0 : i32
    %c0_i32_0 = arith.constant 0 : i32
    %c0_i32_1 = arith.constant 0 : i32
    return %c0_i32, %c0_i32_0 : i32, i32
  }
  func.func @transform_4(%arg0: i32) -> (i32, i32) {
    %c0_i32 = arith.constant 0 : i32
    %c0_i32_0 = arith.constant 0 : i32
    %c0_i32_1 = arith.constant 0 : i32
    return %c0_i32, %c0_i32_0 : i32, i32
  }
  func.func @transform_5(%arg0: i32) -> (i32, i32) {
    %c0_i32 = arith.constant 0 : i32
    %c0_i32_0 = arith.constant 0 : i32
    %c0_i32_1 = arith.constant 0 : i32
    return %c0_i32, %c0_i32_0 : i32, i32
  }
  func.func @transform_6(%arg0: i32) -> (i32, i32) {
    %c0_i32 = arith.constant 0 : i32
    %c0_i32_0 = arith.constant 0 : i32
    return %arg0, %c0_i32 : i32, i32
  }
  func.func @transform_7(%arg0: i32) -> (i32, i32) {
    %c0_i32 = arith.constant 0 : i32
    %c0_i32_0 = arith.constant 0 : i32
    return %arg0, %c0_i32 : i32, i32
  }
}

</mosaic_0001>

<llo_original>
// kernel: forward.1
$region0: #{forward.1}
  #allocation0 [shape = 'u32[]', space=smem, size = 0x4, offset = 0x4, fixed_abs, tag = 'smem constant byte address 0x4 - core index']
  #allocation1 [shape = 'u32[144,128]{1,0:T(1,128)}', space=vmem, size = 0x12000, scoped, tag = 'internal scratch']
  %s0 = inlined_call_operand.vmem [shape: f32[9], index: 0, kind: input, shape index: {}]
  %s1 = inlined_call_operand.vmem [shape: f32[8,128], index: 1, kind: input, shape index: {}]
  %s2 = inlined_call_operand.hbm [shape: bf16[128,128], index: 2, kind: input, shape index: {}]
  %s3 = inlined_call_operand.hbm [shape: bf16[128,128], index: 3, kind: input, shape index: {}]
  %s4 = inlined_call_operand.hbm [shape: bf16[128,128], index: 4, kind: input, shape index: {}]
  %s5 = inlined_call_operand.vmem [shape: f32[3,128], index: 5, kind: input, shape index: {}]
  %s6 = inlined_call_operand.vmem [shape: f32[8,128], index: 6, kind: output, shape index: {0}]
  %s7 = inlined_call_operand.vmem [shape: f32[8,128], index: 7, kind: output, shape index: {1}]
  %8 = xla_tuple %s6, %s7
  %s9 = sld [smem:[#allocation0]]
  $region58: #{forward.1} parent=0
    _
  %s11 = ssub.s32 1, %s9
  %s12 = scalar_select 0, %s11, %s9
  $region1: #{forward.1} parent=0
    #allocation2 [shape = 'u8[512]{0}', space=smem, size = 0x200, scoped, tag = 'input window, operand 0, single buffered']
    #allocation3 [shape = 's32[1]{0}', space=sflag, size = 0x4, scoped, tag = 'scoped memory for forward.1']
    #allocation4 [shape = 's32[1]{0}', space=sflag, size = 0x4, scoped, tag = 'scoped memory for forward.1']
    #allocation5 [shape = 'u8[32768]{0}', space=vmem, size = 0x8000, scoped, tag = 'input window, operand 2, single buffered']
    #allocation6 [shape = 'u8[32768]{0}', space=vmem, size = 0x8000, scoped, tag = 'input window, operand 3, single buffered']
    #allocation7 [shape = 's32[1]{0}', space=sflag, size = 0x4, scoped, tag = 'scoped memory for forward.1']
    #allocation8 [shape = 'u8[32768]{0}', space=vmem, size = 0x8000, scoped, tag = 'input window, operand 4, single buffered']
    %13 = vsyncpa [#allocation4], 0
    %14 = vsyncpa [#allocation3], 0
    %15 = vsyncpa [#allocation7], 0
    // Predicated region
    $region2: #{forward.1} parent=1 // pred_check
      _
    $region3: #{forward.1} parent=1 // pred_check_branch
      %17 = sbr.rel (0) target = $region5
    $region4: #{forward.1} parent=1 // pred_region
      %s19 = ssub.s32 16, 16
      %20 = vsyncadd [#allocation4], %s19
      %s22 = sshll.u32 %s0, 4
      %s23 = int_to_ptr.vmem [resolvable:$true] %s22
      %25 = dma.vmem_to_smem %s23, 16, [#allocation2], [#allocation4]
    $region5: #{forward.1} parent=1 // pred_fallthru
      _
    // Predicated region
    $region6: #{forward.1} parent=1 // pred_check
      _
    $region7: #{forward.1} parent=1 // pred_check_branch
      %27 = sbr.rel (0) target = $region9
    $region8: #{forward.1} parent=1 // pred_region
      _
    $region9: #{forward.1} parent=1 // pred_fallthru
      _
    // Predicated region
    $region10: #{forward.1} parent=1 // pred_check
      _
    $region11: #{forward.1} parent=1 // pred_check_branch
      %29 = sbr.rel (0) target = $region13
    $region12: #{forward.1} parent=1 // pred_region
      %s31 = ssub.s32 1024, 1024
      %32 = vsyncadd [#allocation3], %s31
      %s33 = sshll.u32 [#allocation5], 4
      %s34 = int_to_ptr.vmem [resolvable:$true] %s33
      %39 = dma.hbm_to_vmem [thread:$0]  %s2, 1024, %s34, [#allocation3], 64, 64, 4
    $region13: #{forward.1} parent=1 // pred_fallthru
      _
    // Predicated region
    $region14: #{forward.1} parent=1 // pred_check
      _
    $region15: #{forward.1} parent=1 // pred_check_branch
      %41 = sbr.rel (0) target = $region17
    $region16: #{forward.1} parent=1 // pred_region
      %s43 = ssub.s32 1024, 1024
      %44 = vsyncadd [#allocation7], %s43
      %s45 = sshll.u32 [#allocation6], 4
      %s46 = int_to_ptr.vmem [resolvable:$true] %s45
      %51 = dma.hbm_to_vmem [thread:$0]  %s3, 1024, %s46, [#allocation7], 64, 64, 4
    $region17: #{forward.1} parent=1 // pred_fallthru
      _
    // Predicated region
    $region18: #{forward.1} parent=1 // pred_check
      _
    $region19: #{forward.1} parent=1 // pred_check_branch
      %53 = sbr.rel (0) target = $region21
    $region20: #{forward.1} parent=1 // pred_region
      %s55 = ssub.s32 1024, 1024
      %56 = vsyncadd [#allocation7], %s55
      %s57 = sshll.u32 [#allocation8], 4
      %s58 = int_to_ptr.vmem [resolvable:$true] %s57
      %63 = dma.hbm_to_vmem [thread:$0]  %s4, 1024, %s58, [#allocation7], 64, 64, 4
    $region21: #{forward.1} parent=1 // pred_fallthru
      _
    // Predicated region
    $region22: #{forward.1} parent=1 // pred_check
      _
    $region23: #{forward.1} parent=1 // pred_check_branch
      %65 = sbr.rel (0) target = $region25
    $region24: #{forward.1} parent=1 // pred_region
      _
    $region25: #{forward.1} parent=1 // pred_fallthru
      _
    // Predicated region
    $region26: #{forward.1} parent=1 // pred_check
      _
    $region27: #{forward.1} parent=1 // pred_check_branch
      %67 = sbr.rel (0) target = $region29
    $region28: #{forward.1} parent=1 // pred_region
      %68 = dma.done [#allocation4], 16
    $region29: #{forward.1} parent=1 // pred_fallthru
      _
    // Predicated region
    $region30: #{forward.1} parent=1 // pred_check
      _
    $region31: #{forward.1} parent=1 // pred_check_branch
      %70 = sbr.rel (0) target = $region33
    $region32: #{forward.1} parent=1 // pred_region
      %71 = dma.done [#allocation3], 1024
    $region33: #{forward.1} parent=1 // pred_fallthru
      _
    // Predicated region
    $region34: #{forward.1} parent=1 // pred_check
      _
    $region35: #{forward.1} parent=1 // pred_check_branch
      %73 = sbr.rel (0) target = $region37
    $region36: #{forward.1} parent=1 // pred_region
      %74 = dma.done [#allocation7], 1024
    $region37: #{forward.1} parent=1 // pred_fallthru
      _
    // Predicated region
    $region38: #{forward.1} parent=1 // pred_check
      _
    $region39: #{forward.1} parent=1 // pred_check_branch
      %76 = sbr.rel (0) target = $region41
    $region40: #{forward.1} parent=1 // pred_region
      %77 = dma.done [#allocation7], 1024
    $region41: #{forward.1} parent=1 // pred_fallthru
      _
    %78 = sfence
    %v80 = vlaneseq
    %v81 = vshrl.u32 %v80, 7
    %s82 = smul.u32 0, 8
    %v83 = vstv %s82
    %v84 = vadd.s32 %v81, %v83
    %vm85 = vcmp.lt.s32.totalorder %v84, 2
    %86 = vst [vmem:[%s7] sm:$0xff] 0.0
    %v87 = vld [vmem:[%s1] sm:$0xff]
    %v88 = vld [vmem:[#allocation5] sm:$0xf]
    %v89 = vld [vmem:[#allocation5 + $0x4] sm:$0xf]
    %v90 = vld [vmem:[#allocation5 + $0x8] sm:$0xf]
    %v91 = vld [vmem:[#allocation5 + $0xc] sm:$0xf]
    %v92 = vld [vmem:[#allocation5 + $0x10] sm:$0xf]
    %v93 = vld [vmem:[#allocation5 + $0x14] sm:$0xf]
    %v94 = vld [vmem:[#allocation5 + $0x18] sm:$0xf]
    %v95 = vld [vmem:[#allocation5 + $0x1c] sm:$0xf]
    %v96 = vld [vmem:[#allocation5 + $0x20] sm:$0xf]
    %v97 = vld [vmem:[#allocation5 + $0x24] sm:$0xf]
    %v98 = vld [vmem:[#allocation5 + $0x28] sm:$0xf]
    %v99 = vld [vmem:[#allocation5 + $0x2c] sm:$0xf]
    %v100 = vld [vmem:[#allocation5 + $0x30] sm:$0xf]
    %v101 = vld [vmem:[#allocation5 + $0x34] sm:$0xf]
    %v102 = vld [vmem:[#allocation5 + $0x38] sm:$0xf]
    %v103 = vld [vmem:[#allocation5 + $0x3c] sm:$0xf]
    %v104 = vld [vmem:[%s5] sm:$0x1]
    %s105 = sld [smem:[#allocation2 + $0x1]]
    %s106 = sld [smem:[#allocation2 + $0x2]]
    %s107 = ssub.f32 %s106, %s105
    %v108 = vstv %s107
    %v109 = vsub.f32 %v108, %v104
    %v110 = vstv %s105
    %v111 = vsub.f32 %v87, %v110
    %v112 = vpack.c.bf16 %v111, %v111
    %v113 = vlaneseq
    %v114 = vshrl.u32 %v113, 7
    %v115 = vsub.s32 0, %v114
    %v116 = vrot.slane %v109, %v115
    %v133 = vunpack.c.l.b16 %v88
    %v134 = vunpack.c.l.b16 %v89
    %v135 = vunpack.c.l.b16 %v90
    %v136 = vunpack.c.l.b16 %v91
    %v137 = vunpack.c.l.b16 %v92
    %v138 = vunpack.c.l.b16 %v93
    %v139 = vunpack.c.l.b16 %v94
    %v140 = vunpack.c.l.b16 %v95
    %v141 = vunpack.c.l.b16 %v96
    %v142 = vunpack.c.l.b16 %v97
    %v143 = vunpack.c.l.b16 %v98
    %v144 = vunpack.c.l.b16 %v99
    %v145 = vunpack.c.l.b16 %v100
    %v146 = vunpack.c.l.b16 %v101
    %v147 = vunpack.c.l.b16 %v102
    %v148 = vunpack.c.l.b16 %v103
    %v149 = vpack.c.b16 %v134, %v133
    %v150 = vpack.c.b16 %v136, %v135
    %v151 = vpack.c.b16 %v138, %v137
    %v152 = vpack.c.b16 %v140, %v139
    %v153 = vpack.c.b16 %v142, %v141
    %v154 = vpack.c.b16 %v144, %v143
    %v155 = vpack.c.b16 %v146, %v145
    %v156 = vpack.c.b16 %v148, %v147
    %165 = vmatprep.subr.bf16.mxu0 0
    %166 = vmatpush1.bf16.msra.mxu0 %v156
    %167 = vmatprep.subr.bf16.mxu0 0
    %168 = vmatpush1.bf16.msra.mxu0 %v155
    %169 = vmatprep.subr.bf16.mxu0 0
    %170 = vmatpush1.bf16.msra.mxu0 %v154
    %171 = vmatprep.subr.bf16.mxu0 0
    %172 = vmatpush1.bf16.msra.mxu0 %v153
    %173 = vmatprep.subr.bf16.mxu0 0
    %174 = vmatpush1.bf16.msra.mxu0 %v152
    %175 = vmatprep.subr.bf16.mxu0 0
    %176 = vmatpush1.bf16.msra.mxu0 %v151
    %177 = vmatprep.subr.bf16.mxu0 0
    %178 = vmatpush1.bf16.msra.mxu0 %v150
    %179 = vmatprep.subr.bf16.mxu0 0
    %180 = vmatpush1.bf16.msra.mxu0 %v149
    %181 = vmatprep.subr.bf16.mxu0 0
    %182 = vmatpush2.bf16.msra.mxu0 0
    %183 = vmatprep.subr.bf16.mxu0 0
    %184 = vmatpush2.bf16.msra.mxu0 0
    %185 = vmatprep.subr.bf16.mxu0 0
    %186 = vmatpush2.bf16.msra.mxu0 0
    %187 = vmatprep.subr.bf16.mxu0 0
    %188 = vmatpush2.bf16.msra.mxu0 0
    %189 = vmatprep.subr.bf16.mxu0 0
    %190 = vmatpush2.bf16.msra.mxu0 0
    %191 = vmatprep.subr.bf16.mxu0 0
    %192 = vmatpush2.bf16.msra.mxu0 0
    %193 = vmatprep.subr.bf16.mxu0 0
    %194 = vmatpush2.bf16.msra.mxu0 0
    %195 = vmatprep.subr.bf16.mxu0 0
    %196 = vmatpush2.bf16.msra.mxu0 0
    %197 = vmatprep.mubr.bf16.mxu0 0
    %198 = vmatmul.mubr.bf16.gmra.mxu0 %v112
    %v199 = vpop.f32.mrf.mxu0
    %v200 = vadd.f32 %v116, %v199
    %v201 = vpop.f32.mrf.mxu0
    %v202 = vpop.f32.mrf.mxu0
    %v203 = vpop.f32.mrf.mxu0
    %204 = vdwg.mxu0
    %v205 = vadd.f32 %v200, %v110
    %v206 = vstv %s106
    %vm207 = vcmp.lt.f32.partialorder %v205, %v206
    %v208 = vsel %vm207, %v205, %v206
    %v209 = vlaneseq
    %v210 = vand.u32 %v209, 127
    %vm211 = vcmp.lt.s32.totalorder %v210, 32
    %v212 = vsel %vm85, 1, 0
    %vm213 = vcmp.eq.s32.totalorder %v212, 1
    %vm214 = vmand %vm213, %vm211
    %vm215 = vcmp.lt.f32.partialorder %v208, %v206
    %vm216 = vmand %vm214, %vm215
    %v217 = vsel %vm216, %v208, %v206
    %v218 = vrot.slane %v217, 4
    %v219 = vmin.f32 %v217, %v218
    %v220 = vrot.slane %v219, 2
    %v221 = vmin.f32 %v219, %v220
    %v222 = vrot.slane %v221, 1
    %v223 = vmin.f32 %v221, %v222
    %224 = vst [vmem:[%s7] sm:$0x1] %v223
    %v225 = vld [vmem:[#allocation6] sm:$0xf]
    %v226 = vld [vmem:[#allocation6 + $0x4] sm:$0xf]
    %v227 = vld [vmem:[#allocation6 + $0x8] sm:$0xf]
    %v228 = vld [vmem:[#allocation6 + $0xc] sm:$0xf]
    %v229 = vld [vmem:[#allocation6 + $0x10] sm:$0xf]
    %v230 = vld [vmem:[#allocation6 + $0x14] sm:$0xf]
    %v231 = vld [vmem:[#allocation6 + $0x18] sm:$0xf]
    %v232 = vld [vmem:[#allocation6 + $0x1c] sm:$0xf]
    %v233 = vld [vmem:[#allocation6 + $0x20] sm:$0xf]
    %v234 = vld [vmem:[#allocation6 + $0x24] sm:$0xf]
    %v235 = vld [vmem:[#allocation6 + $0x28] sm:$0xf]
    %v236 = vld [vmem:[#allocation6 + $0x2c] sm:$0xf]
    %v237 = vld [vmem:[#allocation6 + $0x30] sm:$0xf]
    %v238 = vld [vmem:[#allocation6 + $0x34] sm:$0xf]
    %v239 = vld [vmem:[#allocation6 + $0x38] sm:$0xf]
    %v240 = vld [vmem:[#allocation6 + $0x3c] sm:$0xf]
    %v241 = vld [vmem:[%s5 + $0x1] sm:$0x1]
    %s242 = sld [smem:[#allocation2 + $0x4]]
    %s243 = sld [smem:[#allocation2 + $0x5]]
    %s244 = ssub.f32 %s243, %s242
    %v245 = vstv %s244
    %v246 = vsub.f32 %v245, %v241
    %v247 = vstv %s242
    %v248 = vsub.f32 %v208, %v247
    %v249 = vpack.c.bf16 %v248, %v248
    %v250 = vlaneseq
    %v251 = vshrl.u32 %v250, 7
    %v252 = vsub.s32 0, %v251
    %v253 = vrot.slane %v246, %v252
    %v270 = vunpack.c.l.b16 %v225
    %v271 = vunpack.c.l.b16 %v226
    %v272 = vunpack.c.l.b16 %v227
    %v273 = vunpack.c.l.b16 %v228
    %v274 = vunpack.c.l.b16 %v229
    %v275 = vunpack.c.l.b16 %v230
    %v276 = vunpack.c.l.b16 %v231
    %v277 = vunpack.c.l.b16 %v232
    %v278 = vunpack.c.l.b16 %v233
    %v279 = vunpack.c.l.b16 %v234
    %v280 = vunpack.c.l.b16 %v235
    %v281 = vunpack.c.l.b16 %v236
    %v282 = vunpack.c.l.b16 %v237
    %v283 = vunpack.c.l.b16 %v238
    %v284 = vunpack.c.l.b16 %v239
    %v285 = vunpack.c.l.b16 %v240
    %v286 = vpack.c.b16 %v271, %v270
    %v287 = vpack.c.b16 %v273, %v272
    %v288 = vpack.c.b16 %v275, %v274
    %v289 = vpack.c.b16 %v277, %v276
    %v290 = vpack.c.b16 %v279, %v278
    %v291 = vpack.c.b16 %v281, %v280
    %v292 = vpack.c.b16 %v283, %v282
    %v293 = vpack.c.b16 %v285, %v284
    %302 = vmatprep.subr.bf16.mxu0 0
    %303 = vmatpush1.bf16.msra.mxu0 %v293
    %304 = vmatprep.subr.bf16.mxu0 0
    %305 = vmatpush1.bf16.msra.mxu0 %v292
    %306 = vmatprep.subr.bf16.mxu0 0
    %307 = vmatpush1.bf16.msra.mxu0 %v291
    %308 = vmatprep.subr.bf16.mxu0 0
    %309 = vmatpush1.bf16.msra.mxu0 %v290
    %310 = vmatprep.subr.bf16.mxu0 0
    %311 = vmatpush1.bf16.msra.mxu0 %v289
    %312 = vmatprep.subr.bf16.mxu0 0
    %313 = vmatpush1.bf16.msra.mxu0 %v288
    %314 = vmatprep.subr.bf16.mxu0 0
    %315 = vmatpush1.bf16.msra.mxu0 %v287
    %316 = vmatprep.subr.bf16.mxu0 0
    %317 = vmatpush1.bf16.msra.mxu0 %v286
    %318 = vmatprep.subr.bf16.mxu0 0
    %319 = vmatpush2.bf16.msra.mxu0 0
    %320 = vmatprep.subr.bf16.mxu0 0
    %321 = vmatpush2.bf16.msra.mxu0 0
    %322 = vmatprep.subr.bf16.mxu0 0
    %323 = vmatpush2.bf16.msra.mxu0 0
    %324 = vmatprep.subr.bf16.mxu0 0
    %325 = vmatpush2.bf16.msra.mxu0 0
    %326 = vmatprep.subr.bf16.mxu0 0
    %327 = vmatpush2.bf16.msra.mxu0 0
    %328 = vmatprep.subr.bf16.mxu0 0
    %329 = vmatpush2.bf16.msra.mxu0 0
    %330 = vmatprep.subr.bf16.mxu0 0
    %331 = vmatpush2.bf16.msra.mxu0 0
    %332 = vmatprep.subr.bf16.mxu0 0
    %333 = vmatpush2.bf16.msra.mxu0 0
    %334 = vmatprep.mubr.bf16.mxu0 0
    %335 = vmatmul.mubr.bf16.gmra.mxu0 %v249
    %v336 = vpop.f32.mrf.mxu0
    %v337 = vadd.f32 %v253, %v336
    %v338 = vpop.f32.mrf.mxu0
    %v339 = vpop.f32.mrf.mxu0
    %v340 = vpop.f32.mrf.mxu0
    %341 = vdwg.mxu0
    %v342 = vadd.f32 %v337, %v247
    %v343 = vstv %s243
    %vm344 = vcmp.lt.f32.partialorder %v342, %v343
    %v345 = vsel %vm344, %v342, %v343
    %vm346 = vcmp.lt.f32.partialorder %v345, %v343
    %vm347 = vmand %vm214, %vm346
    %v348 = vsel %vm347, %v345, %v343
    %v349 = vrot.slane %v348, 4
    %v350 = vmin.f32 %v348, %v349
    %v351 = vrot.slane %v350, 2
    %v352 = vmin.f32 %v350, %v351
    %v353 = vrot.slane %v352, 1
    %v354 = vmin.f32 %v352, %v353
    %355 = vst [vmem:[%s7 + $0x1] sm:$0x1] %v354
    %v356 = vld [vmem:[#allocation8] sm:$0xf]
    %v357 = vld [vmem:[#allocation8 + $0x4] sm:$0xf]
    %v358 = vld [vmem:[#allocation8 + $0x8] sm:$0xf]
    %v359 = vld [vmem:[#allocation8 + $0xc] sm:$0xf]
    %v360 = vld [vmem:[#allocation8 + $0x10] sm:$0xf]
    %v361 = vld [vmem:[#allocation8 + $0x14] sm:$0xf]
    %v362 = vld [vmem:[#allocation8 + $0x18] sm:$0xf]
    %v363 = vld [vmem:[#allocation8 + $0x1c] sm:$0xf]
    %v364 = vld [vmem:[#allocation8 + $0x20] sm:$0xf]
    %v365 = vld [vmem:[#allocation8 + $0x24] sm:$0xf]
    %v366 = vld [vmem:[#allocation8 + $0x28] sm:$0xf]
    %v367 = vld [vmem:[#allocation8 + $0x2c] sm:$0xf]
    %v368 = vld [vmem:[#allocation8 + $0x30] sm:$0xf]
    %v369 = vld [vmem:[#allocation8 + $0x34] sm:$0xf]
    %v370 = vld [vmem:[#allocation8 + $0x38] sm:$0xf]
    %v371 = vld [vmem:[#allocation8 + $0x3c] sm:$0xf]
    %v372 = vld [vmem:[%s5 + $0x2] sm:$0x1]
    %s373 = sld [smem:[#allocation2 + $0x6]]
    %s374 = sld [smem:[#allocation2 + $0x7]]
    %v375 = vstv %s374
    %v376 = vsub.f32 %v375, %v345
    %v377 = vpack.c.bf16 %v376, %v376
    %v394 = vunpack.c.l.b16 %v356
    %v395 = vunpack.c.l.b16 %v357
    %v396 = vunpack.c.l.b16 %v358
    %v397 = vunpack.c.l.b16 %v359
    %v398 = vunpack.c.l.b16 %v360
    %v399 = vunpack.c.l.b16 %v361
    %v400 = vunpack.c.l.b16 %v362
    %v401 = vunpack.c.l.b16 %v363
    %v402 = vunpack.c.l.b16 %v364
    %v403 = vunpack.c.l.b16 %v365
    %v404 = vunpack.c.l.b16 %v366
    %v405 = vunpack.c.l.b16 %v367
    %v406 = vunpack.c.l.b16 %v368
    %v407 = vunpack.c.l.b16 %v369
    %v408 = vunpack.c.l.b16 %v370
    %v409 = vunpack.c.l.b16 %v371
    %v410 = vpack.c.b16 %v395, %v394
    %v411 = vpack.c.b16 %v397, %v396
    %v412 = vpack.c.b16 %v399, %v398
    %v413 = vpack.c.b16 %v401, %v400
    %v414 = vpack.c.b16 %v403, %v402
    %v415 = vpack.c.b16 %v405, %v404
    %v416 = vpack.c.b16 %v407, %v406
    %v417 = vpack.c.b16 %v409, %v408
    %426 = vmatprep.subr.bf16.mxu0 0
    %427 = vmatpush1.bf16.msra.mxu0 %v417
    %428 = vmatprep.subr.bf16.mxu0 0
    %429 = vmatpush1.bf16.msra.mxu0 %v416
    %430 = vmatprep.subr.bf16.mxu0 0
    %431 = vmatpush1.bf16.msra.mxu0 %v415
    %432 = vmatprep.subr.bf16.mxu0 0
    %433 = vmatpush1.bf16.msra.mxu0 %v414
    %434 = vmatprep.subr.bf16.mxu0 0
    %435 = vmatpush1.bf16.msra.mxu0 %v413
    %436 = vmatprep.subr.bf16.mxu0 0
    %437 = vmatpush1.bf16.msra.mxu0 %v412
    %438 = vmatprep.subr.bf16.mxu0 0
    %439 = vmatpush1.bf16.msra.mxu0 %v411
    %440 = vmatprep.subr.bf16.mxu0 0
    %441 = vmatpush1.bf16.msra.mxu0 %v410
    %442 = vmatprep.subr.bf16.mxu0 0
    %443 = vmatpush2.bf16.msra.mxu0 0
    %444 = vmatprep.subr.bf16.mxu0 0
    %445 = vmatpush2.bf16.msra.mxu0 0
    %446 = vmatprep.subr.bf16.mxu0 0
    %447 = vmatpush2.bf16.msra.mxu0 0
    %448 = vmatprep.subr.bf16.mxu0 0
    %449 = vmatpush2.bf16.msra.mxu0 0
    %450 = vmatprep.subr.bf16.mxu0 0
    %451 = vmatpush2.bf16.msra.mxu0 0
    %452 = vmatprep.subr.bf16.mxu0 0
    %453 = vmatpush2.bf16.msra.mxu0 0
    %454 = vmatprep.subr.bf16.mxu0 0
    %455 = vmatpush2.bf16.msra.mxu0 0
    %456 = vmatprep.subr.bf16.mxu0 0
    %457 = vmatpush2.bf16.msra.mxu0 0
    %458 = vmatprep.mubr.bf16.mxu0 0
    %459 = vmatmul.mubr.bf16.gmra.mxu0 %v377
    %v460 = vpop.f32.mrf.mxu0
    %v461 = vadd.f32 0.0, %v460
    %v462 = vpop.f32.mrf.mxu0
    %v463 = vpop.f32.mrf.mxu0
    %v464 = vpop.f32.mrf.mxu0
    %465 = vdwg.mxu0
    %s466 = ssub.f32 %s374, %s373
    %p467 = scmp.eq.f32.partialorder %s466, 0.0
    %s468 = scalar_select %p467, 1e-09, %s466
    %v469 = vstv %s468
    %v470 = vrcp.pop %v469
    %v471 = vmul.f32 %v372, %v470
    %v472 = vstv %s466
    %v473 = vmul.f32 %v471, %v472
    %v474 = vlaneseq
    %v475 = vshrl.u32 %v474, 7
    %v476 = vsub.s32 0, %v475
    %v477 = vrot.slane %v473, %v476
    %v478 = vadd.f32 %v477, %v461
    %479 = vst [vmem:[%s6] sm:$0xff] %v478
    // Predicated region
    $region42: #{forward.1} parent=1 // pred_check
      _
    $region43: #{forward.1} parent=1 // pred_check_branch
      %481 = sbr.rel (0) target = $region45
    $region44: #{forward.1} parent=1 // pred_region
      _
    $region45: #{forward.1} parent=1 // pred_fallthru
      _
    // Predicated region
    $region46: #{forward.1} parent=1 // pred_check
      _
    $region47: #{forward.1} parent=1 // pred_check_branch
      %483 = sbr.rel (0) target = $region49
    $region48: #{forward.1} parent=1 // pred_region
      _
    $region49: #{forward.1} parent=1 // pred_fallthru
      _
    // Predicated region
    $region50: #{forward.1} parent=1 // pred_check
      _
    $region51: #{forward.1} parent=1 // pred_check_branch
      %485 = sbr.rel (0) target = $region53
    $region52: #{forward.1} parent=1 // pred_region
      _
    $region53: #{forward.1} parent=1 // pred_fallthru
      _
    // Predicated region
    $region54: #{forward.1} parent=1 // pred_check
      _
    $region55: #{forward.1} parent=1 // pred_check_branch
      %487 = sbr.rel (0) target = $region57
    $region56: #{forward.1} parent=1 // pred_region
      _
    $region57: #{forward.1} parent=1 // pred_fallthru
      _
    %488 = vsyncpa [#allocation3], 1
    %489 = vsyncpa [#allocation7], 1
    %490 = vsyncpa [#allocation4], 1

</llo_original>
